<compile_context>
chip_gen: v5e
topology: v5e:2x2
jax: 0.10.0
libtpu: 0.0.40
codegen_flags: <defaults>
</compile_context>

<pallas_src>
import functools

import jax
import jax.numpy as jnp
from jax import lax
from jax.experimental import pallas as pl
from jax.experimental.pallas import tpu as pltpu

# ----- module hyper-parameters (the **kwargs of the reference CycleGAN DiscBlock) -----
KERNEL_SIZE = 4
STRIDE = 2
PADDING = 1          # reflect padding
EPS = 1e-5           # InstanceNorm2d default eps
NEG_SLOPE = 0.2      # LeakyReLU slope

# Shift groups (dh, dw) = (kh // 2, kw // 2); g = 2*dh + dw.
_GROUPS = ((0, 0), (0, 1), (1, 0), (1, 1))


def _round_up(v, m):
    return (v + m - 1) // m * m


def _discblock_kernel(mask_ref, xq_ref, w_ref, o_ref, *, wh, l_acc, inv_p):
    """Fused conv(4x4, s2, reflect) + InstanceNorm2d + LeakyReLU for one
    (batch, C_out-tile) grid step.

    mask_ref: (1, L_acc)         f32  validity mask of the padded flat spatial axis
    xq_ref  : (4*C_in, L_in)     bf16 row/col-parity planes, flattened spatial axis
    w_ref   : (4, co_tile, 4*C_in) bf16 per-shift-group conv weights
    o_ref   : (co_tile, L_acc)   bf16
    """
    # Shifted-matmul accumulation over the 4 shift groups (16 conv taps total,
    # 4 taps fused per matmul via the parity planes in the contraction dim).
    acc = None
    for g, (dh, dw) in enumerate(_GROUPS):
        start = dh * wh + dw                          # static: 0, 1, Wh, Wh+1
        rhs = xq_ref[:, pl.ds(start, l_acc)]          # (4*C_in, L_acc) bf16
        part = jnp.dot(w_ref[g], rhs, preferred_element_type=jnp.float32)
        acc = part if acc is None else acc + part     # (co_tile, L_acc) f32

    # InstanceNorm2d (no affine) over the valid spatial positions only.
    # Two-pass variance (cancellation-safe); deviation reused for normalize.
    m = mask_ref[...]                                  # (1, L_acc) f32 {0,1}
    mean = jnp.sum(acc * m, axis=-1, keepdims=True) * inv_p
    d = acc - mean
    var = jnp.sum((d * m) * d, axis=-1, keepdims=True) * inv_p
    t = d * lax.rsqrt(var + EPS)

    # LeakyReLU(0.2) as a single max (valid since 0 < slope < 1).
    o_ref[...] = jnp.maximum(t, NEG_SLOPE * t).astype(o_ref.dtype)


def _pick_co_tile(c_out):
    """256 on 256-wide-MXU chips (v6e/v7x) when divisible, else 128, else full."""
    try:
        kind = jax.devices()[0].device_kind.lower()
    except Exception:  # pragma: no cover - defensive
        kind = ""
    small_mxu = any(t in kind for t in ("v2", "v3", "v4", "v5"))
    if (not small_mxu) and c_out % 256 == 0:
        return 256
    if c_out % 128 == 0:
        return 128
    return c_out


def _prep_inputs(x, weight):
    """Reflect-pad + row/column parity split (cheap, ~input-sized XLA pre-pass).

    Returns:
      mask : (1, L_acc) f32   validity mask of the padded flat output axis
      xq   : (N, 4*C_in, L_in) bf16 parity planes, flattened (row-pitch = Wh)
      wg   : (4, C_out, 4*C_in) bf16 per-shift-group conv weights
      dims : (H_out, W_out, Wh, L_in, L_acc)
    """
    N, C, H, W = x.shape
    C_out = weight.shape[0]

    xb = x.astype(jnp.bfloat16)
    x_pad = jnp.pad(xb, ((0, 0), (0, 0), (PADDING, PADDING), (PADDING, PADDING)),
                    mode="reflect")
    Hp, Wp = H + 2 * PADDING, W + 2 * PADDING
    H_out = (Hp - KERNEL_SIZE) // STRIDE + 1
    W_out = (Wp - KERNEL_SIZE) // STRIDE + 1
    Hh, Wh = (Hp + 1) // 2, (Wp + 1) // 2

    # Pad to even #rows/#cols so the parity split is a pure reshape; the extra
    # row/col is only ever read by masked (invalid) output columns.
    x_pad = jnp.pad(x_pad, ((0, 0), (0, 0), (0, 2 * Hh - Hp), (0, 2 * Wh - Wp)))

    # (N, C, Hh, 2, Wh, 2) -> (N, ph, pw, C, Hh, Wh) -> (N, 4*C, Hh*Wh)
    xq = x_pad.reshape(N, C, Hh, 2, Wh, 2)
    xq = xq.transpose(0, 3, 5, 1, 2, 4).reshape(N, 4 * C, Hh * Wh)

    # Lane-axis sizes: output/accumulator length (128-aligned for lane-dense
    # stores) and input length with slack so every shifted window stays in bounds.
    L_acc = _round_up(H_out * Wh, 128)
    L_in = _round_up(Hh * Wh, 128) + _round_up(Wh + 1, 128)
    xq = jnp.pad(xq, ((0, 0), (0, 0), (0, L_in - Hh * Wh)))

    # Conv weights regrouped by shift group g=(dh,dw) with contraction axis
    # ordered (parity plane p = 2*ph + pw, c) to match xq's 4*C axis.
    w6 = weight.reshape(C_out, C, 2, 2, 2, 2)            # (o, c, dh, ph, dw, pw)
    wg = w6.transpose(2, 4, 0, 3, 5, 1).reshape(4, C_out, 4 * C)
    wg = wg.astype(jnp.bfloat16)

    jj = jnp.arange(L_acc, dtype=jnp.int32)
    valid = ((jj // Wh) < H_out) & ((jj % Wh) < W_out)
    mask = valid.astype(jnp.float32)[None, :]            # (1, L_acc)

    return mask, xq, wg, (H_out, W_out, Wh, L_in, L_acc)


def disc_block_forward(x, weight, bias):
    """x: (N, C_in, H, W) NCHW; weight: (C_out, C_in, 4, 4); bias: (C_out,).

    NOTE: `bias` is intentionally unused — InstanceNorm2d (affine=False) always
    follows the conv in this module and subtracts the per-channel mean, which
    cancels a per-channel constant bias exactly."""
    del bias
    N, C_in, H, W = x.shape
    C_out = weight.shape[0]

    mask, xq, wg, (H_out, W_out, Wh, L_in, L_acc) = _prep_inputs(x, weight)
    P = H_out * W_out
    K4 = 4 * C_in

    co_tile = _pick_co_tile(C_out)
    n_co = C_out // co_tile

    # ---- VMEM budget (review): plane block (1-2 bufs), weight block (2 bufs),
    # bf16 out block (2 bufs), f32 epilogue intermediate, mask, compiler slack.
    xq_block = K4 * L_in * 2
    single_buffer_xq = (N == 1) or (xq_block > 8 * 1024 * 1024)
    xq_bufs = 1 if single_buffer_xq else 2
    vmem_needed = (xq_bufs * xq_block
                   + 2 * 4 * co_tile * K4 * 2       # weight block, double-buffered
                   + 2 * co_tile * L_acc * 2        # bf16 out block, double-buffered
                   + co_tile * L_acc * 4            # f32 accumulator / epilogue
                   + 2 * L_acc * 4                  # mask
                   + (2 << 20))                     # Mosaic internal scratch slack
    vmem_limit = int(min(max(vmem_needed, 32 * 1024 * 1024), 48 * 1024 * 1024))

    xq_spec_kwargs = {}
    if single_buffer_xq:
        # Review: drop the second parity-plane buffer when batch == 1 or the
        # block is large — its block index never changes within a batch element.
        xq_spec_kwargs["pipeline_mode"] = pl.Buffered(1)
    xq_spec = pl.BlockSpec((pl.Squeezed(), K4, L_in), lambda n, c: (n, 0, 0),
                           **xq_spec_kwargs)

    kernel = functools.partial(_discblock_kernel,
                               wh=Wh, l_acc=L_acc, inv_p=1.0 / P)

    out_flat = pl.pallas_call(
        kernel,
        out_shape=jax.ShapeDtypeStruct((N, C_out, L_acc), jnp.bfloat16),
        grid_spec=pltpu.PrefetchScalarGridSpec(
            num_scalar_prefetch=0,
            grid=(N, n_co),
            in_specs=[
                pl.BlockSpec((1, L_acc), lambda n, c: (0, 0)),        # mask (resident)
                xq_spec,                                              # parity planes
                pl.BlockSpec((4, co_tile, K4), lambda n, c: (0, c, 0)),  # weights
            ],
            out_specs=pl.BlockSpec((pl.Squeezed(), co_tile, L_acc),
                                   lambda n, c: (n, c, 0)),
        ),
        compiler_params=pltpu.CompilerParams(
            dimension_semantics=("parallel", "arbitrary"),
            vmem_limit_bytes=vmem_limit),
    )(mask, xq, wg)

    # Strip the per-row padding column(s) and lane round-up: cheap reshape+slice
    # (no transpose) back to NCHW.
    out = out_flat[:, :, :H_out * Wh].reshape(N, C_out, H_out, Wh)[..., :W_out]
    return out


def _reference(x, weight, bias):
    """Pure-JAX f32 reference mirroring the PyTorch module (bias included)."""
    x_pad = jnp.pad(x, ((0, 0), (0, 0), (PADDING, PADDING), (PADDING, PADDING)),
                    mode="reflect")
    y = lax.conv_general_dilated(
        x_pad, weight, window_strides=(STRIDE, STRIDE), padding="VALID",
        dimension_numbers=("NCHW", "OIHW", "NCHW"))
    y = y + bias.reshape(1, -1, 1, 1)
    mean = jnp.mean(y, axis=(2, 3), keepdims=True)
    var = jnp.mean((y - mean) ** 2, axis=(2, 3), keepdims=True)
    y = (y - mean) / jnp.sqrt(var + EPS)
    return jnp.where(y >= 0, y, NEG_SLOPE * y)


if __name__ == "__main__":
    key = jax.random.PRNGKey(0)
    kx, kw, kb = jax.random.split(key, 3)

    N, C_in, H, W = 2, 4, 16, 16
    C_out = 8

    x = jax.random.normal(kx, (N, C_in, H, W), dtype=jnp.float32)
    weight = 0.1 * jax.random.normal(kw, (C_out, C_in, KERNEL_SIZE, KERNEL_SIZE),
                                     dtype=jnp.float32)
    bias = 0.1 * jax.random.normal(kb, (C_out,), dtype=jnp.float32)

    fwd = jax.jit(disc_block_forward)
    out = jax.block_until_ready(fwd(x, weight, bias))

    ref = jax.block_until_ready(_reference(x, weight, bias))
    assert out.shape == ref.shape, (out.shape, ref.shape)
    # bf16 MXU operands / bf16 output vs. the pure-f32 reference.
    assert jnp.allclose(out.astype(jnp.float32), ref, atol=5e-2, rtol=5e-2), \
        "mismatch vs reference"

    print("KERNEL_OK")
</pallas_src>

<mosaic_0001>
module attributes {stable_mosaic.version = 11 : i64} {
  func.func @_discblock_kernel(%arg0: i32, %arg1: i32, %arg2: memref<1x128xf32, #tpu.memory_space<vmem>>, %arg3: memref<1x16x256xbf16, #tpu.memory_space<vmem>>, %arg4: memref<4x8x16xbf16, #tpu.memory_space<vmem>>, %arg5: memref<1x8x128xbf16, #tpu.memory_space<vmem>>) attributes {dimension_semantics = [#tpu.dimension_semantics<parallel>, #tpu.dimension_semantics<arbitrary>], iteration_bounds = array<i64: 2, 1>, scalar_prefetch = 0 : i64, scratch_operands = 0 : i64, tpu.core_type = #tpu.core_type<tc>, window_params = [{pipeline_mode = #tpu.pipeline_mode<synchronous>, transform_indices = @transform_0, window_bounds = array<i64: 1, 128>}, {transform_indices = @transform_1, window_bounds = array<i64: 1, 16, 256>}, {transform_indices = @transform_2, window_bounds = array<i64: 4, 8, 16>}, {transform_indices = @transform_3, window_bounds = array<i64: 1, 8, 128>}]} {
    %c0 = arith.constant 0 : index
    %c0_0 = arith.constant 0 : index
    %c0_1 = arith.constant 0 : index
    %0 = vector.load %arg3[%c0, %c0_0, %c0_1] : memref<1x16x256xbf16, #tpu.memory_space<vmem>>, vector<1x16x128xbf16>
    %1 = vector.shape_cast %0 : vector<1x16x128xbf16> to vector<16x128xbf16>
    %c0_2 = arith.constant 0 : index
    %c0_3 = arith.constant 0 : index
    %c0_4 = arith.constant 0 : index
    %2 = vector.load %arg4[%c0_2, %c0_3, %c0_4] : memref<4x8x16xbf16, #tpu.memory_space<vmem>>, vector<1x8x16xbf16>
    %3 = vector.shape_cast %2 : vector<1x8x16xbf16> to vector<8x16xbf16>
    %cst = arith.constant dense<0.000000e+00> : vector<8x128xf32>
    %4 = tpu.matmul %3, %1, %cst {dimension_numbers = #tpu.dot_dimension_numbers<[1], [0], [0], [1], [0, 0, 1, 1], [], []>} : vector<8x16xbf16>, vector<16x128xbf16>, vector<8x128xf32> -> vector<8x128xf32>
    %c0_5 = arith.constant 0 : index
    %c0_6 = arith.constant 0 : index
    %c1 = arith.constant 1 : index
    %5 = vector.load %arg3[%c0_5, %c0_6, %c1] : memref<1x16x256xbf16, #tpu.memory_space<vmem>>, vector<1x16x128xbf16>
    %6 = vector.shape_cast %5 : vector<1x16x128xbf16> to vector<16x128xbf16>
    %c1_7 = arith.constant 1 : index
    %c0_8 = arith.constant 0 : index
    %c0_9 = arith.constant 0 : index
    %7 = vector.load %arg4[%c1_7, %c0_8, %c0_9] : memref<4x8x16xbf16, #tpu.memory_space<vmem>>, vector<1x8x16xbf16>
    %8 = vector.shape_cast %7 : vector<1x8x16xbf16> to vector<8x16xbf16>
    %cst_10 = arith.constant dense<0.000000e+00> : vector<8x128xf32>
    %9 = tpu.matmul %8, %6, %cst_10 {dimension_numbers = #tpu.dot_dimension_numbers<[1], [0], [0], [1], [0, 0, 1, 1], [], []>} : vector<8x16xbf16>, vector<16x128xbf16>, vector<8x128xf32> -> vector<8x128xf32>
    %10 = arith.addf %4, %9 : vector<8x128xf32>
    %c0_11 = arith.constant 0 : index
    %c0_12 = arith.constant 0 : index
    %c9 = arith.constant 9 : index
    %11 = vector.load %arg3[%c0_11, %c0_12, %c9] : memref<1x16x256xbf16, #tpu.memory_space<vmem>>, vector<1x16x128xbf16>
    %12 = vector.shape_cast %11 : vector<1x16x128xbf16> to vector<16x128xbf16>
    %c2 = arith.constant 2 : index
    %c0_13 = arith.constant 0 : index
    %c0_14 = arith.constant 0 : index
    %13 = vector.load %arg4[%c2, %c0_13, %c0_14] : memref<4x8x16xbf16, #tpu.memory_space<vmem>>, vector<1x8x16xbf16>
    %14 = vector.shape_cast %13 : vector<1x8x16xbf16> to vector<8x16xbf16>
    %cst_15 = arith.constant dense<0.000000e+00> : vector<8x128xf32>
    %15 = tpu.matmul %14, %12, %cst_15 {dimension_numbers = #tpu.dot_dimension_numbers<[1], [0], [0], [1], [0, 0, 1, 1], [], []>} : vector<8x16xbf16>, vector<16x128xbf16>, vector<8x128xf32> -> vector<8x128xf32>
    %16 = arith.addf %10, %15 : vector<8x128xf32>
    %c0_16 = arith.constant 0 : index
    %c0_17 = arith.constant 0 : index
    %c10 = arith.constant 10 : index
    %17 = vector.load %arg3[%c0_16, %c0_17, %c10] : memref<1x16x256xbf16, #tpu.memory_space<vmem>>, vector<1x16x128xbf16>
    %18 = vector.shape_cast %17 : vector<1x16x128xbf16> to vector<16x128xbf16>
    %c3 = arith.constant 3 : index
    %c0_18 = arith.constant 0 : index
    %c0_19 = arith.constant 0 : index
    %19 = vector.load %arg4[%c3, %c0_18, %c0_19] : memref<4x8x16xbf16, #tpu.memory_space<vmem>>, vector<1x8x16xbf16>
    %20 = vector.shape_cast %19 : vector<1x8x16xbf16> to vector<8x16xbf16>
    %cst_20 = arith.constant dense<0.000000e+00> : vector<8x128xf32>
    %21 = tpu.matmul %20, %18, %cst_20 {dimension_numbers = #tpu.dot_dimension_numbers<[1], [0], [0], [1], [0, 0, 1, 1], [], []>} : vector<8x16xbf16>, vector<16x128xbf16>, vector<8x128xf32> -> vector<8x128xf32>
    %22 = arith.addf %16, %21 : vector<8x128xf32>
    %c0_21 = arith.constant 0 : index
    %c0_22 = arith.constant 0 : index
    %23 = vector.load %arg2[%c0_21, %c0_22] : memref<1x128xf32, #tpu.memory_space<vmem>>, vector<1x128xf32>
    %24 = vector.broadcast %23 : vector<1x128xf32> to vector<8x128xf32>
    %25 = arith.mulf %22, %24 : vector<8x128xf32>
    %cst_23 = arith.constant dense<0.000000e+00> : vector<8xf32>
    %26 = vector.multi_reduction <add>, %25, %cst_23 [1] : vector<8x128xf32> to vector<8xf32>
    %27 = vector.shape_cast %26 : vector<8xf32> to vector<8x1xf32>
    %cst_24 = arith.constant 1.562500e-02 : f32
    %28 = vector.broadcast %cst_24 : f32 to vector<8x1xf32>
    %29 = arith.mulf %27, %28 : vector<8x1xf32>
    %30 = vector.broadcast %29 : vector<8x1xf32> to vector<8x128xf32>
    %31 = arith.subf %22, %30 : vector<8x128xf32>
    %32 = vector.broadcast %23 : vector<1x128xf32> to vector<8x128xf32>
    %33 = arith.mulf %31, %32 : vector<8x128xf32>
    %34 = arith.mulf %33, %31 : vector<8x128xf32>
    %cst_25 = arith.constant dense<0.000000e+00> : vector<8xf32>
    %35 = vector.multi_reduction <add>, %34, %cst_25 [1] : vector<8x128xf32> to vector<8xf32>
    %36 = vector.shape_cast %35 : vector<8xf32> to vector<8x1xf32>
    %cst_26 = arith.constant 1.562500e-02 : f32
    %37 = vector.broadcast %cst_26 : f32 to vector<8x1xf32>
    %38 = arith.mulf %36, %37 : vector<8x1xf32>
    %cst_27 = arith.constant 9.99999974E-6 : f32
    %39 = vector.broadcast %cst_27 : f32 to vector<8x1xf32>
    %40 = arith.addf %38, %39 : vector<8x1xf32>
    %41 = math.rsqrt %40 : vector<8x1xf32>
    %42 = vector.broadcast %41 : vector<8x1xf32> to vector<8x128xf32>
    %43 = arith.mulf %31, %42 : vector<8x128xf32>
    %cst_28 = arith.constant 2.000000e-01 : f32
    %44 = vector.broadcast %cst_28 : f32 to vector<8x128xf32>
    %45 = arith.mulf %44, %43 : vector<8x128xf32>
    %46 = arith.maximumf %43, %45 : vector<8x128xf32>
    %47 = arith.truncf %46 : vector<8x128xf32> to vector<8x128xbf16>
    %c0_29 = arith.constant 0 : index
    %c0_30 = arith.constant 0 : index
    %c0_31 = arith.constant 0 : index
    %48 = vector.load %arg5[%c0_29, %c0_30, %c0_31] : memref<1x8x128xbf16, #tpu.memory_space<vmem>>, vector<1x8x128xbf16>
    %49 = vector.shape_cast %48 : vector<1x8x128xbf16> to vector<8x128xbf16>
    %50 = vector.shape_cast %47 : vector<8x128xbf16> to vector<1x8x128xbf16>
    tpu.vector_store %arg5[%c0_29, %c0_30, %c0_31], %50 {strides = array<i32>} : memref<1x8x128xbf16, #tpu.memory_space<vmem>>, vector<1x8x128xbf16>,
    return
  }
  func.func @transform_0(%arg0: i32, %arg1: i32) -> (i32, i32) {
    %c0_i32 = arith.constant 0 : i32
    %c0_i32_0 = arith.constant 0 : i32
    %c0_i32_1 = arith.constant 0 : i32
    return %c0_i32, %c0_i32_0 : i32, i32
  }
  func.func @transform_1(%arg0: i32, %arg1: i32) -> (i32, i32, i32) {
    %c0_i32 = arith.constant 0 : i32
    %c0_i32_0 = arith.constant 0 : i32
    %c0_i32_1 = arith.constant 0 : i32
    return %arg0, %c0_i32, %c0_i32_0 : i32, i32, i32
  }
  func.func @transform_2(%arg0: i32, %arg1: i32) -> (i32, i32, i32) {
    %c0_i32 = arith.constant 0 : i32
    %c0_i32_0 = arith.constant 0 : i32
    %c0_i32_1 = arith.constant 0 : i32
    return %c0_i32, %arg1, %c0_i32_0 : i32, i32, i32
  }
  func.func @transform_3(%arg0: i32, %arg1: i32) -> (i32, i32, i32) {
    %c0_i32 = arith.constant 0 : i32
    %c0_i32_0 = arith.constant 0 : i32
    return %arg0, %arg1, %c0_i32 : i32, i32, i32
  }
}

</mosaic_0001>

<llo_original>
// kernel: disc_block_forward.1
$region0: #{disc_block_forward.1}
  #allocation0 [shape = 'u32[]', space=smem, size = 0x4, offset = 0x4, fixed_abs, tag = 'smem constant byte address 0x4 - core index']
  #allocation1 [shape = 'u32[72,128]{1,0:T(1,128)}', space=vmem, size = 0x9000, scoped, tag = 'internal scratch']
  %s0 = inlined_call_operand.vmem [shape: f32[1,128], index: 0, kind: input, shape index: {}]
  %s1 = inlined_call_operand.vmem [shape: bf16[2,16,256], index: 1, kind: input, shape index: {}]
  %s2 = inlined_call_operand.vmem [shape: bf16[4,8,16], index: 2, kind: input, shape index: {}]
  %s3 = inlined_call_operand.vmem [shape: bf16[2,8,128], index: 3, kind: output, shape index: {}]
  %s4 = sld [smem:[#allocation0]]
  $region45: #{disc_block_forward.1} parent=0
    _
  %s6 = ssub.s32 1, %s4
  %s7 = scalar_select 0, %s6, %s4
  loop: start=0, step=1, limit=4
  $region2: #{disc_block_forward.1} parent=0 // loop_pre_header
    _
  $region3: #{disc_block_forward.1} parent=0 // loop_header
    %s9 = sphi 0, %s13
    %p10 = scmp.ge.s32.totalorder %s9, 4
    %s16 = sphi 0, %s28
    %s17 = sphi 0, %s24
    %s18 = sphi 0, %s16
    %s19 = sphi 0, %s17
    %s20 = sphi 0, %s18
    %s21 = sphi 0, %s19
    %s29 = sphi 0, %s29
    %s31 = sphi 0, %s29
    %s32 = sphi 0, %s31
    %s46 = sphi 0, %s32
    %s52 = sphi 0, %s54
    %s55 = sphi 0, %s52
    %s56 = sphi 0, %s55
    %s72 = sphi 0, %s56
    %s78 = sphi 0, %s80
    %s81 = sphi 0, %s78
    %s82 = sphi 0, %s81
    %s98 = sphi 0, %s82
    %s106 = sphi 0, %s108
    %s109 = sphi 0, %s106
    %s110 = sphi 0, %s109
    %s126 = sphi 0, %s110
  $region4: #{disc_block_forward.1} parent=0 // loop_header_branch
    %12 = sbr.rel (%p10) target = $region8
  $region5: #{disc_block_forward.1} parent=0 // loop_body
    %s14 = ssub.s32 %s9, 1
    %s15 = ssub.s32 %s9, 2
    %s22 = sadd.s32 1, %s17
    %p23 = scmp.ge.s32.totalorder %s22, 1
    %s24 = scalar_select %p23, 0, %s22
    %s25 = sadd.s32 1, %s16
    %s26 = scalar_select %p23, %s25, %s16
    %p27 = scmp.ge.s32.totalorder %s26, 2
    %s28 = scalar_select %p27, 0, %s26
    %s30 = sadd.s32 %s29, 1
    %p33 = scmp.eq.s32.totalorder %s9, 1
    %p34 = scmp.ne.s32.totalorder %s29, %s31
    %p35 = scmp.eq.s32.totalorder %s9, 0
    %p36 = por %p34, %p35
    %p37 = scmp.ne.s32.totalorder %s29, %s31
    %p38 = scmp.eq.s32.totalorder %s14, 1
    %p39 = por %p37, %p38
    %p40 = scmp.ne.s32.totalorder %s31, %s32
    %p41 = scmp.eq.s32.totalorder %s14, 0
    %p42 = por %p40, %p41
    %p43 = scmp.ne.s32.totalorder %s31, %s32
    %p44 = scmp.eq.s32.totalorder %s15, 1
    %p45 = por %p43, %p44
    %p47 = scmp.ne.s32.totalorder %s32, %s46
    %p48 = scmp.eq.s32.totalorder %s15, 0
    %p49 = por %p47, %p48
    %s50 = ssub.s32 %s16, %s28
    %p51 = scmp.eq.s32.totalorder %s50, 0
    %s53 = sadd.s32 %s52, 1
    %s54 = scalar_select %p51, %s52, %s53
    %p57 = pneg %p51
    %p58 = scmp.eq.s32.totalorder %s9, 1
    %p59 = por %p57, %p58
    %p60 = scmp.ne.s32.totalorder %s52, %s55
    %p61 = scmp.eq.s32.totalorder %s9, 0
    %p62 = por %p60, %p61
    %p63 = scmp.ne.s32.totalorder %s52, %s55
    %p64 = scmp.eq.s32.totalorder %s14, 1
    %p65 = por %p63, %p64
    %p66 = scmp.ne.s32.totalorder %s55, %s56
    %p67 = scmp.eq.s32.totalorder %s14, 0
    %p68 = por %p66, %p67
    %p69 = scmp.ne.s32.totalorder %s55, %s56
    %p70 = scmp.eq.s32.totalorder %s15, 1
    %p71 = por %p69, %p70
    %p73 = scmp.ne.s32.totalorder %s56, %s72
    %p74 = scmp.eq.s32.totalorder %s15, 0
    %p75 = por %p73, %p74
    %s76 = ssub.s32 %s17, %s24
    %p77 = scmp.eq.s32.totalorder %s76, 0
    %s79 = sadd.s32 %s78, 1
    %s80 = scalar_select %p77, %s78, %s79
    %p83 = pneg %p77
    %p84 = scmp.eq.s32.totalorder %s9, 1
    %p85 = por %p83, %p84
    %p86 = scmp.ne.s32.totalorder %s78, %s81
    %p87 = scmp.eq.s32.totalorder %s9, 0
    %p88 = por %p86, %p87
    %p89 = scmp.ne.s32.totalorder %s78, %s81
    %p90 = scmp.eq.s32.totalorder %s14, 1
    %p91 = por %p89, %p90
    %p92 = scmp.ne.s32.totalorder %s81, %s82
    %p93 = scmp.eq.s32.totalorder %s14, 0
    %p94 = por %p92, %p93
    %p95 = scmp.ne.s32.totalorder %s81, %s82
    %p96 = scmp.eq.s32.totalorder %s15, 1
    %p97 = por %p95, %p96
    %p99 = scmp.ne.s32.totalorder %s82, %s98
    %p100 = scmp.eq.s32.totalorder %s15, 0
    %p101 = por %p99, %p100
    %s102 = ssub.s32 %s16, %s28
    %s103 = ssub.s32 %s17, %s24
    %s104 = sor.u32 %s102, %s103
    %p105 = scmp.eq.s32.totalorder %s104, 0
    %s107 = sadd.s32 %s106, 1
    %s108 = scalar_select %p105, %s106, %s107
    %p111 = pneg %p105
    %p112 = scmp.eq.s32.totalorder %s9, 1
    %p113 = por %p111, %p112
    %p114 = scmp.ne.s32.totalorder %s106, %s109
    %p115 = scmp.eq.s32.totalorder %s9, 0
    %p116 = por %p114, %p115
    %p117 = scmp.ne.s32.totalorder %s106, %s109
    %p118 = scmp.eq.s32.totalorder %s14, 1
    %p119 = por %p117, %p118
    %p120 = scmp.ne.s32.totalorder %s109, %s110
    %p121 = scmp.eq.s32.totalorder %s14, 0
    %p122 = por %p120, %p121
    %p123 = scmp.ne.s32.totalorder %s109, %s110
    %p124 = scmp.eq.s32.totalorder %s15, 1
    %p125 = por %p123, %p124
    %p127 = scmp.ne.s32.totalorder %s110, %s126
    %p128 = scmp.eq.s32.totalorder %s15, 0
    %p129 = por %p127, %p128
    %p130 = scmp.le.s32.totalorder 1, %s9
    %p131 = scmp.lt.s32.totalorder %s9, 3
    %p132 = pnand %p130, %p131
    %p133 = pneg %p132
    // Predicated region
    $region9: #{disc_block_forward.1} parent=5 // pred_check
      _
    $region10: #{disc_block_forward.1} parent=5 // pred_check_branch
      %135 = sbr.rel (%p132) target = $region12
    $region11: #{disc_block_forward.1} parent=5 // pred_region
      %s136 = ssub.s32 %s9, 1
      // Predicated region
      $region13: #{disc_block_forward.1} parent=11 // pred_check
        %p137 = pneg %p42
      $region14: #{disc_block_forward.1} parent=11 // pred_check_branch
        %139 = sbr.rel (%p137) target = $region16
      $region15: #{disc_block_forward.1} parent=11 // pred_region
        _
      $region16: #{disc_block_forward.1} parent=11 // pred_fallthru
        _
      // Predicated region
      $region17: #{disc_block_forward.1} parent=11 // pred_check
        %p140 = pneg %p94
      $region18: #{disc_block_forward.1} parent=11 // pred_check_branch
        %142 = sbr.rel (%p140) target = $region20
      $region19: #{disc_block_forward.1} parent=11 // pred_region
        %p143 = scmp.lt.s32.totalorder %s19, 0
        %s144 = scalar_select %p143, %s19, 0
        %s145 = smul.addr %s144, 4
        %s146 = scalar_lea.vmem %s2, %s145
      $region20: #{disc_block_forward.1} parent=11 // pred_fallthru
        _
    $region12: #{disc_block_forward.1} parent=5 // pred_fallthru
      _
    %p147 = scmp.lt.s32.totalorder %s9, 2
    // Predicated region
    $region21: #{disc_block_forward.1} parent=5 // pred_check
      %p148 = pneg %p147
    $region22: #{disc_block_forward.1} parent=5 // pred_check_branch
      %150 = sbr.rel (%p148) target = $region24
    $region23: #{disc_block_forward.1} parent=5 // pred_region
      // Predicated region
      $region25: #{disc_block_forward.1} parent=23 // pred_check
        %p151 = pneg %p62
      $region26: #{disc_block_forward.1} parent=23 // pred_check_branch
        %153 = sbr.rel (%p151) target = $region28
      $region27: #{disc_block_forward.1} parent=23 // pred_region
        %p154 = scmp.lt.s32.totalorder %s16, 1
        %s155 = scalar_select %p154, %s16, 1
        %s156 = smul.addr %s155, 4
        %s157 = smul.addr %s156, 4
        %s158 = scalar_lea.vmem %s1, %s157
      $region28: #{disc_block_forward.1} parent=23 // pred_fallthru
        _
    $region24: #{disc_block_forward.1} parent=5 // pred_fallthru
      _
    %p159 = scmp.le.s32.totalorder 1, %s9
    %p160 = scmp.lt.s32.totalorder %s9, 3
    %p161 = pnand %p159, %p160
    %p162 = pneg %p161
    // Predicated region
    $region29: #{disc_block_forward.1} parent=5 // pred_check
      _
    $region30: #{disc_block_forward.1} parent=5 // pred_check_branch
      %164 = sbr.rel (%p161) target = $region32
    $region31: #{disc_block_forward.1} parent=5 // pred_region
      %s165 = ssub.s32 %s9, 1
      %p166 = pneg %p42
      %p167 = pneg %p39
      %p168 = scmp.lt.s32.totalorder %s18, 1
      %s169 = scalar_select %p168, %s18, 1
      %s170 = smul.addr %s169, 4
      %s171 = smul.addr %s170, 4
      %s172 = scalar_lea.vmem %s1, %s171
      %p173 = pneg %p68
      %p174 = pneg %p65
      %p175 = scmp.lt.s32.totalorder %s19, 0
      %s176 = scalar_select %p175, %s19, 0
      %s177 = smul.addr %s176, 4
      %s178 = scalar_lea.vmem %s2, %s177
      %p179 = pneg %p94
      %p180 = pneg %p91
      %p181 = pneg %p122
      %p182 = pneg %p119
      %p183 = scmp.lt.s32.totalorder %s18, 1
      %s184 = scalar_select %p183, %s18, 1
      %p185 = scmp.lt.s32.totalorder %s19, 0
      %s186 = scalar_select %p185, %s19, 0
      %s187 = sadd.s32 %s186, %s184
      %s188 = smul.addr %s187, 4
      %s189 = scalar_lea.vmem %s3, %s188
      %p190 = scmp.lt.s32.totalorder %s18, 1
      %s191 = scalar_select %p190, %s18, 1
      %s192 = smul.addr %s191, 4
      %s193 = smul.addr %s192, 4
      %s194 = scalar_lea.vmem %s1, %s193
      %p195 = scmp.lt.s32.totalorder %s19, 0
      %s196 = scalar_select %p195, %s19, 0
      %s197 = smul.addr %s196, 4
      %s198 = scalar_lea.vmem %s2, %s197
      %p199 = scmp.lt.s32.totalorder %s18, 1
      %s200 = scalar_select %p199, %s18, 1
      %p201 = scmp.lt.s32.totalorder %s19, 0
      %s202 = scalar_select %p201, %s19, 0
      %s203 = sadd.s32 %s202, %s200
      %s204 = smul.addr %s203, 4
      %s205 = scalar_lea.vmem %s3, %s204
      %v207 = vld [vmem:[%s194] sm:$0xf]
      %v208 = vld [vmem:[%s194 + $0x8] sm:$0xf]
      %v209 = vld [vmem:[%s198] sm:$0xf]
      %v210 = vld [vmem:[%s194] sm:$0xff]
      %v211 = vld [vmem:[%s194 + $0x8] sm:$0xff]
      %s212 = scalar_lea.vmem %s198, 4
      %v213 = vld [vmem:[%s212] sm:$0xf]
      %v216 = vunpack.c.l.b16 %v210
      %v217 = vunpack.c.h.b16 %v210
      %v218 = vunpack.c.l.b16 %v211
      %v219 = vunpack.c.h.b16 %v211
      %v220 = vpack.c.b16 %v218, %v216
      %v221 = vpack.c.b16 %v219, %v217
      %222 = vrot.lane.b32.xlu0 %v220, 127
      %v223 = vpop.permute.xlu0 %222
      %224 = vrot.lane.b32.xlu0 %v221, 127
      %v225 = vpop.permute.xlu0 %224
      %vm226 = vcmask 1039360
      %v227 = vsel %vm226, %v223, %v225
      %vm229 = vcmask 130048
      %v231 = vsel %vm229, %v213, 0
      %233 = vmatpush.bf16.msra.mxu0 0
      %234 = vmatpush.bf16.msra.mxu0 0
      %235 = vmatpush.bf16.msra.mxu0 0
      %236 = vmatpush.bf16.msra.mxu0 0
      %237 = vmatpush.bf16.msra.mxu0 0
      %238 = vmatpush.bf16.msra.mxu0 0
      %239 = vmatpush.bf16.msra.mxu0 0
      %240 = vmatpush.bf16.msra.mxu0 %v227
      %241 = vmatmul.bf16.gmra.mxu0 %v231
      %v242 = vpop.f32.mrf.mxu0
      %v243 = vadd.f32 0.0, %v242
      %v244 = vpop.f32.mrf.mxu0
      %245 = vdwg.mxu0
      %v248 = vunpack.c.l.b16 %v207
      %v249 = vunpack.c.l.b16 %v208
      %v250 = vpack.c.b16 %v249, %v248
      %v253 = vsel %vm229, %v209, 0
      %255 = vmatpush.bf16.msra.mxu0 0
      %256 = vmatpush.bf16.msra.mxu0 0
      %257 = vmatpush.bf16.msra.mxu0 0
      %258 = vmatpush.bf16.msra.mxu0 0
      %259 = vmatpush.bf16.msra.mxu0 0
      %260 = vmatpush.bf16.msra.mxu0 0
      %261 = vmatpush.bf16.msra.mxu0 0
      %262 = vmatpush.bf16.msra.mxu0 %v250
      %263 = vmatmul.bf16.gmra.mxu0 %v253
      %v264 = vpop.f32.mrf.mxu0
      %v265 = vadd.f32 %v243, %v264
      %v266 = vpop.f32.mrf.mxu0
      %267 = vdwg.mxu0
      %s268 = scalar_lea.vmem %s198, 8
      %v269 = vld [vmem:[%s268] sm:$0xf]
      %270 = vrot.lane.b32.xlu0 %v220, 119
      %v271 = vpop.permute.xlu0 %270
      %272 = vrot.lane.b32.xlu0 %v221, 119
      %v273 = vpop.permute.xlu0 %272
      %vm274 = vcmask 973824
      %v275 = vsel %vm274, %v271, %v273
      %v278 = vsel %vm229, %v269, 0
      %280 = vmatpush.bf16.msra.mxu0 0
      %281 = vmatpush.bf16.msra.mxu0 0
      %282 = vmatpush.bf16.msra.mxu0 0
      %283 = vmatpush.bf16.msra.mxu0 0
      %284 = vmatpush.bf16.msra.mxu0 0
      %285 = vmatpush.bf16.msra.mxu0 0
      %286 = vmatpush.bf16.msra.mxu0 0
      %287 = vmatpush.bf16.msra.mxu0 %v275
      %288 = vmatmul.bf16.gmra.mxu0 %v278
      %v289 = vpop.f32.mrf.mxu0
      %v290 = vadd.f32 0.0, %v289
      %v291 = vpop.f32.mrf.mxu0
      %292 = vdwg.mxu0
      %v293 = vadd.f32 %v265, %v290
      %s294 = scalar_lea.vmem %s198, 12
      %v295 = vld [vmem:[%s294] sm:$0xf]
      %296 = vrot.lane.b32.xlu0 %v220, 118
      %v297 = vpop.permute.xlu0 %296
      %298 = vrot.lane.b32.xlu0 %v221, 118
      %v299 = vpop.permute.xlu0 %298
      %vm300 = vcmask 965632
      %v301 = vsel %vm300, %v297, %v299
      %v304 = vsel %vm229, %v295, 0
      %306 = vmatpush.bf16.msra.mxu0 0
      %307 = vmatpush.bf16.msra.mxu0 0
      %308 = vmatpush.bf16.msra.mxu0 0
      %309 = vmatpush.bf16.msra.mxu0 0
      %310 = vmatpush.bf16.msra.mxu0 0
      %311 = vmatpush.bf16.msra.mxu0 0
      %312 = vmatpush.bf16.msra.mxu0 0
      %313 = vmatpush.bf16.msra.mxu0 %v301
      %314 = vmatmul.bf16.gmra.mxu0 %v304
      %v315 = vpop.f32.mrf.mxu0
      %v316 = vadd.f32 0.0, %v315
      %v317 = vpop.f32.mrf.mxu0
      %318 = vdwg.mxu0
      %v319 = vadd.f32 %v293, %v316
      %v320 = vld [vmem:[%s0] sm:$0x1]
      %v322 = vperm.slane %v320, 0
      %v324 = vmul.f32 %v319, %v322
      %325 = vadd.xlane.f32.xlu0 %v324
      %v326 = vpop.xlane.xlu0 %325
      %v327 = vmul.f32 %v326, 0.015625
      %v328 = vsub.f32 %v319, %v327
      %v329 = vmul.f32 %v328, %v322
      %v330 = vmul.f32 %v329, %v328
      %331 = vadd.xlane.f32.xlu0 %v330
      %v332 = vpop.xlane.xlu0 %331
      %v333 = vmul.f32 %v332, 0.015625
      %v334 = vadd.f32 %v333, 1e-05
      %v335 = vrsqrt.pop %v334
      %v336 = vmul.f32 %v335, %v334
      %v337 = vmul.f32 %v336, %v335
      %v338 = vmul.f32 0.5, %v337
      %v339 = vsub.f32 1.5, %v338
      %v340 = vmul.f32 %v335, %v339
      %vm341 = vweird.f32 %v334
      %vm342 = vweird.f32 %v335
      %vm343 = vmor %vm341, %vm342
      %v344 = vsel %vm343, %v335, %v340
      %v345 = vmul.f32 %v328, %v344
      %v346 = vmul.f32 %v345, 0.2
      %v347 = vmax.f32 %v345, %v346
      %v348 = vpack.c.bf16 %v347, %v347
      %349 = vst [vmem:[%s205] sm:$0xf] %v348
      %p350 = scmp.lt.s32.totalorder %s18, 1
      %s351 = scalar_select %p350, %s18, 1
      %p352 = scmp.lt.s32.totalorder %s19, 0
      %s353 = scalar_select %p352, %s19, 0
      %s354 = sadd.s32 %s353, %s351
      %s355 = smul.addr %s354, 4
      %s356 = scalar_lea.vmem %s3, %s355
      // Predicated region
      $region33: #{disc_block_forward.1} parent=31 // pred_check
        %p357 = pneg %p119
      $region34: #{disc_block_forward.1} parent=31 // pred_check_branch
        %359 = sbr.rel (%p357) target = $region36
      $region35: #{disc_block_forward.1} parent=31 // pred_region
        _
      $region36: #{disc_block_forward.1} parent=31 // pred_fallthru
        _
    $region32: #{disc_block_forward.1} parent=5 // pred_fallthru
      _
    %p360 = scmp.le.s32.totalorder 2, %s9
    // Predicated region
    $region37: #{disc_block_forward.1} parent=5 // pred_check
      %p361 = pneg %p360
    $region38: #{disc_block_forward.1} parent=5 // pred_check_branch
      %363 = sbr.rel (%p361) target = $region40
    $region39: #{disc_block_forward.1} parent=5 // pred_region
      %s364 = ssub.s32 %s9, 2
      // Predicated region
      $region41: #{disc_block_forward.1} parent=39 // pred_check
        %p365 = pneg %p125
      $region42: #{disc_block_forward.1} parent=39 // pred_check_branch
        %367 = sbr.rel (%p365) target = $region44
      $region43: #{disc_block_forward.1} parent=39 // pred_region
        %p368 = scmp.lt.s32.totalorder %s20, 1
        %s369 = scalar_select %p368, %s20, 1
        %p370 = scmp.lt.s32.totalorder %s21, 0
        %s371 = scalar_select %p370, %s21, 0
        %s372 = sadd.s32 %s371, %s369
        %s373 = smul.addr %s372, 4
        %s374 = scalar_lea.vmem %s3, %s373
      $region44: #{disc_block_forward.1} parent=39 // pred_fallthru
        _
    $region40: #{disc_block_forward.1} parent=5 // pred_fallthru
      _
  $region6: #{disc_block_forward.1} parent=0 // loop_footer
    %s13 = sadd.s32 1, %s9
  $region7: #{disc_block_forward.1} parent=0 // loop_footer_branch
    %8 = sbr.rel target = $region3
  $region8: #{disc_block_forward.1} parent=0 // loop_exit
    _

</llo_original>
